<compile_context>
chip_gen: v6e
topology: v6e:2x2x1
jax: 0.10.0
libtpu: 0.0.40
codegen_flags: <defaults>
</compile_context>

<pallas_src>
import jax
import jax.numpy as jnp
from jax.experimental import pallas as pl
from jax.experimental.pallas import tpu as pltpu


def _round_up(a: int, b: int) -> int:
    return (a + b - 1) // b * b


def _frq_pos_kernel(pos_ref, freq_ref, out_ref):
    # pos_ref:  (tm, 1)   float32   -- absolute positions (flattened batch*seq)
    # freq_ref: (1, dim)  float32   -- inv_freq repeated pairwise ([f0,f0,f1,f1,...])
    # out_ref:  (tm, dim) float32   -- rotary angles
    out_ref[...] = pos_ref[...] * freq_ref[...]


def frequency_position_encoding(abs_pos, rotated_channels_per_head, *, tm=None):
    """Pallas FrequencyPositionEncoding: abs_pos (B, N) -> angles (B, N, dim)."""
    dim = int(rotated_channels_per_head)
    if dim % 2 != 0:
        raise ValueError("rotated_channels_per_head must be even")
    B, N = abs_pos.shape

    # Module buffer: inv_freq, with each frequency repeated twice ("... f -> ... (f r)", r=2).
    inv_freq = 1.0 / (10000.0 ** (jnp.arange(0, dim, 2, dtype=jnp.float32) / dim))
    inv_freq_rep = jnp.repeat(inv_freq, 2).reshape(1, dim)            # (1, dim)

    M = B * N
    pos2 = abs_pos.reshape(M, 1).astype(jnp.float32)                  # (M, 1)

    if tm is None:
        # Single grid step for typical sizes; multiples of 8 sublanes otherwise.
        tm = min(1024, _round_up(M, 8))
    else:
        tm = _round_up(tm, 8)
    M_p = _round_up(M, tm)
    if M_p != M:
        pos2 = jnp.pad(pos2, ((0, M_p - M), (0, 0)))

    frq = pl.pallas_call(
        _frq_pos_kernel,
        out_shape=jax.ShapeDtypeStruct((M_p, dim), jnp.float32),
        grid_spec=pltpu.PrefetchScalarGridSpec(
            num_scalar_prefetch=0,
            grid=(M_p // tm,),
            in_specs=[
                pl.BlockSpec((tm, 1), lambda i: (i, 0)),      # positions column
                pl.BlockSpec((1, dim), lambda i: (0, 0)),     # freq table, resident
            ],
            out_specs=pl.BlockSpec((tm, dim), lambda i: (i, 0)),
        ),
        compiler_params=pltpu.CompilerParams(
            dimension_semantics=("parallel",),
        ),
        cost_estimate=pl.CostEstimate(
            flops=M_p * dim,
            transcendentals=0,
            bytes_accessed=M_p * 4 + dim * 4 + M_p * dim * 4,
        ),
    )(pos2, inv_freq_rep)

    if M_p != M:
        frq = frq[:M]
    return frq.reshape(B, N, dim)


def rotary_support_forward(x, rotated_channels_per_head, abs_pos=None):
    """RotarySupport.forward: returns (adapter_output, frequency_position_encoding).

    x:       (B, N, C) generic encoder input (or (B, N) token ids)
    abs_pos: optional (B, N) absolute positions; defaults to arange(N) per batch row.
    """
    B, N = x.shape[0], x.shape[1]
    if abs_pos is None:
        # positions(b, n): arange(n) broadcast over the batch dimension.
        abs_pos = jnp.broadcast_to(jnp.arange(N, dtype=jnp.int32), (B, N))

    frq = frequency_position_encoding(abs_pos, rotated_channels_per_head)

    # TODO(synk): the spec'd base class InputAdapter defines no forward(); the
    # task-specific input transform lives in concrete subclasses, so x is
    # returned unchanged here (no fake compute inserted).
    return x, frq


if __name__ == "__main__":
    key = jax.random.PRNGKey(0)
    k1, k2 = jax.random.split(key, 2)

    def ref_frq(abs_pos, dim):
        inv_freq = 1.0 / (10000.0 ** (jnp.arange(0, dim, 2, dtype=jnp.float32) / dim))
        ang = abs_pos.astype(jnp.float32)[..., None] * inv_freq          # (..., dim/2)
        return jnp.repeat(ang, 2, axis=-1)                               # (..., dim)

    # Case 1: default positions (abs_pos=None), small perceiver-like shapes.
    B, N, C, dim = 2, 16, 32, 32
    x = jax.random.normal(k1, (B, N, C), dtype=jnp.float32)
    out_x, out_frq = rotary_support_forward(x, dim)
    out_x = jax.block_until_ready(out_x)
    out_frq = jax.block_until_ready(out_frq)
    abs_pos_def = jnp.broadcast_to(jnp.arange(N, dtype=jnp.int32), (B, N))
    assert out_x.shape == (B, N, C) and bool(jnp.all(out_x == x))
    assert out_frq.shape == (B, N, dim)
    assert jnp.allclose(out_frq, ref_frq(abs_pos_def, dim), atol=1e-5, rtol=1e-5)

    # Case 2: explicit abs_pos, ragged B*N (exercises the row-padding path).
    B2, N2, C2, dim2 = 3, 10, 8, 16
    x2 = jax.random.normal(k2, (B2, N2, C2), dtype=jnp.float32)
    abs_pos2 = jax.random.randint(k2, (B2, N2), 0, 1000, dtype=jnp.int32)
    out_x2, out_frq2 = rotary_support_forward(x2, dim2, abs_pos=abs_pos2)
    out_frq2 = jax.block_until_ready(out_frq2)
    assert out_frq2.shape == (B2, N2, dim2)
    assert jnp.allclose(out_frq2, ref_frq(abs_pos2, dim2), atol=1e-4, rtol=1e-4)
    assert bool(jnp.all(out_x2 == x2))

    print("KERNEL_OK")
</pallas_src>

<mosaic_0001>
module attributes {stable_mosaic.version = 11 : i64} {
  func.func @_frq_pos_kernel(%arg0: i32, %arg1: memref<32x1xf32, #tpu.memory_space<vmem>>, %arg2: memref<1x32xf32, #tpu.memory_space<vmem>>, %arg3: memref<32x32xf32, #tpu.memory_space<vmem>>) attributes {dimension_semantics = [#tpu.dimension_semantics<parallel>], iteration_bounds = array<i64: 1>, scalar_prefetch = 0 : i64, scratch_operands = 0 : i64, tpu.core_type = #tpu.core_type<tc>, window_params = [{transform_indices = @transform_0, window_bounds = array<i64: 32, 1>}, {pipeline_mode = #tpu.pipeline_mode<synchronous>, transform_indices = @transform_1, window_bounds = array<i64: 1, 32>}, {transform_indices = @transform_2, window_bounds = array<i64: 32, 32>}]} {
    %c0 = arith.constant 0 : index
    %c0_0 = arith.constant 0 : index
    %0 = vector.load %arg1[%c0, %c0_0] : memref<32x1xf32, #tpu.memory_space<vmem>>, vector<32x1xf32>
    %c0_1 = arith.constant 0 : index
    %c0_2 = arith.constant 0 : index
    %1 = vector.load %arg2[%c0_1, %c0_2] : memref<1x32xf32, #tpu.memory_space<vmem>>, vector<1x32xf32>
    %2 = vector.broadcast %0 : vector<32x1xf32> to vector<32x32xf32>
    %3 = vector.broadcast %1 : vector<1x32xf32> to vector<32x32xf32>
    %4 = arith.mulf %2, %3 : vector<32x32xf32>
    %c0_3 = arith.constant 0 : index
    %c0_4 = arith.constant 0 : index
    %5 = vector.load %arg3[%c0_3, %c0_4] : memref<32x32xf32, #tpu.memory_space<vmem>>, vector<32x32xf32>
    tpu.vector_store %arg3[%c0_3, %c0_4], %4 {strides = array<i32>} : memref<32x32xf32, #tpu.memory_space<vmem>>, vector<32x32xf32>,
    return
  }
  func.func @transform_0(%arg0: i32) -> (i32, i32) {
    %c0_i32 = arith.constant 0 : i32
    %c0_i32_0 = arith.constant 0 : i32
    return %arg0, %c0_i32 : i32, i32
  }
  func.func @transform_1(%arg0: i32) -> (i32, i32) {
    %c0_i32 = arith.constant 0 : i32
    %c0_i32_0 = arith.constant 0 : i32
    %c0_i32_1 = arith.constant 0 : i32
    return %c0_i32, %c0_i32_0 : i32, i32
  }
  func.func @transform_2(%arg0: i32) -> (i32, i32) {
    %c0_i32 = arith.constant 0 : i32
    %c0_i32_0 = arith.constant 0 : i32
    return %arg0, %c0_i32 : i32, i32
  }
}

</mosaic_0001>

<llo_original>
// kernel: tpu_custom_call.1
$region0: #{tpu_custom_call.1}
  #allocation0 [shape = 'u32[]', space=smem, size = 0x4, offset = 0x4, fixed_abs, tag = 'smem constant byte address 0x4 - core index']
  #allocation1 [shape = 'u32[144,128]{1,0:T(1,128)}', space=vmem, size = 0x12000, scoped, tag = 'internal scratch']
  %s0 = inlined_call_operand.vmem [shape: f32[32,1], index: 0, kind: input, shape index: {}]
  %s1 = inlined_call_operand.vmem [shape: f32[1,32], index: 1, kind: input, shape index: {}]
  %s2 = inlined_call_operand.hbm [shape: f32[32,32], index: 2, kind: output, shape index: {}]
  %s3 = sld [smem:[#allocation0]]
  $region18: #{tpu_custom_call.1} parent=0
    _
  %s5 = ssub.s32 1, %s3
  %s6 = scalar_select 0, %s5, %s3
  $region1: #{tpu_custom_call.1} parent=0
    #allocation2 [shape = 'u8[16384]{0}', space=vmem, size = 0x4000, scoped, tag = 'output window, operand 0, single buffered']
    #allocation3 [shape = 's32[1]{0}', space=sflag, size = 0x4, scoped, tag = 'scoped memory for tpu_custom_call.1']
    %7 = vsyncpa [#allocation3], 0
    // Predicated region
    $region2: #{tpu_custom_call.1} parent=1 // pred_check
      _
    $region3: #{tpu_custom_call.1} parent=1 // pred_check_branch
      %9 = sbr.rel (0) target = $region5
    $region4: #{tpu_custom_call.1} parent=1 // pred_region
      _
    $region5: #{tpu_custom_call.1} parent=1 // pred_fallthru
      _
    // Predicated region
    $region6: #{tpu_custom_call.1} parent=1 // pred_check
      _
    $region7: #{tpu_custom_call.1} parent=1 // pred_check_branch
      %11 = sbr.rel (0) target = $region9
    $region8: #{tpu_custom_call.1} parent=1 // pred_region
      _
    $region9: #{tpu_custom_call.1} parent=1 // pred_fallthru
      _
    %v12 = vld [vmem:[%s0] sm:$0xff]
    %v13 = vld [vmem:[%s0 + $0x8] sm:$0xff]
    %v14 = vld [vmem:[%s0 + $0x10] sm:$0xff]
    %v15 = vld [vmem:[%s0 + $0x18] sm:$0xff]
    %v16 = vld [vmem:[%s1] sm:$0x1]
    %18 = vset.pattern.permute.xlu0 0
    %19 = vperm.xlu0 %18, %v12
    %v20 = vpop.permute.xlu0 %19
    %23 = vset.pattern.permute.xlu0 0
    %24 = vperm.xlu0 %23, %v13
    %v25 = vpop.permute.xlu0 %24
    %28 = vset.pattern.permute.xlu0 0
    %29 = vperm.xlu0 %28, %v14
    %v30 = vpop.permute.xlu0 %29
    %33 = vset.pattern.permute.xlu0 0
    %34 = vperm.xlu0 %33, %v15
    %v35 = vpop.permute.xlu0 %34
    %v38 = vlaneseq
    %v39 = vshrl.u32 %v38, 7
    %v40 = vsub.s32 0, %v39
    %v41 = vrot.slane %v16, %v40
    %v43 = vmul.f32 %v20, %v41
    %v44 = vmul.f32 %v25, %v41
    %v45 = vmul.f32 %v30, %v41
    %v46 = vmul.f32 %v35, %v41
    %vm47 = vcmask 261120
    %48 = vst.msk [vmem:[#allocation2] sm:$0xff] %vm47, %v43
    %49 = vst.msk [vmem:[#allocation2 + $0x8] sm:$0xff] %vm47, %v44
    %50 = vst.msk [vmem:[#allocation2 + $0x10] sm:$0xff] %vm47, %v45
    %51 = vst.msk [vmem:[#allocation2 + $0x18] sm:$0xff] %vm47, %v46
    // Predicated region
    $region10: #{tpu_custom_call.1} parent=1 // pred_check
      _
    $region11: #{tpu_custom_call.1} parent=1 // pred_check_branch
      %53 = sbr.rel (0) target = $region13
    $region12: #{tpu_custom_call.1} parent=1 // pred_region
      %s55 = ssub.s32 512, 512
      %56 = vsyncadd [#allocation3], %s55
      %s57 = sshll.u32 [#allocation2], 4
      %s58 = int_to_ptr.vmem [resolvable:$true] %s57
      %63 = dma.vmem_to_hbm [thread:$0]  %s58, 512, %s2, [#allocation3], 128, 128, 8
    $region13: #{tpu_custom_call.1} parent=1 // pred_fallthru
      _
    // Predicated region
    $region14: #{tpu_custom_call.1} parent=1 // pred_check
      _
    $region15: #{tpu_custom_call.1} parent=1 // pred_check_branch
      %65 = sbr.rel (0) target = $region17
    $region16: #{tpu_custom_call.1} parent=1 // pred_region
      %66 = dma.done [#allocation3], 512
    $region17: #{tpu_custom_call.1} parent=1 // pred_fallthru
      _
    %67 = vsyncpa [#allocation3], 1

</llo_original>
